<compile_context>
chip_gen: v7x
topology: tpu7x:2x2x1
jax: 0.10.0
libtpu: 0.0.40
codegen_flags: <defaults>
</compile_context>

<pallas_src>
import functools

import jax
import jax.numpy as jnp
from jax.experimental import pallas as pl
from jax.experimental.pallas import tpu as pltpu


def _windowed_sum(xp, out_len, k):
    """Sum of k shifted slices: sum_i xp[:, i:i+out_len] (f32 accumulation).

    For large k uses a two-level grouped sum: partial sums of g consecutive
    shifts over a widened window, then k//g coarse shifts of that partial sum
    (plus k%g leftovers) -> ~g + k//g shifted adds instead of k.
    """
    if k == 1:
        return xp[:, 0:out_len]
    if k <= 8:
        acc = xp[:, 0:out_len]
        for i in range(1, k):
            acc = acc + xp[:, i:i + out_len]
        return acc

    # Pick group size g minimizing element work (static Python search).
    best_g, best_cost = 1, None
    for g in range(1, k + 1):
        m, r = divmod(k, g)
        lw = out_len + (m - 1) * g
        cost = g * lw + (m + r) * out_len
        if best_cost is None or cost < best_cost:
            best_g, best_cost = g, cost
    g = best_g
    m, r = divmod(k, g)
    lw = out_len + (m - 1) * g          # widened partial-sum window

    part = xp[:, 0:lw]
    for i in range(1, g):
        part = part + xp[:, i:i + lw]   # part[:, s] = sum_{i<g} xp[:, s+i]

    acc = part[:, 0:out_len]
    for j in range(1, m):
        acc = acc + part[:, j * g:j * g + out_len]    # covers shifts [0, m*g)
    for i in range(m * g, k):                         # leftover shifts
        acc = acc + xp[:, i:i + out_len]
    return acc


def _decomp_kernel(x_ref, res_ref, mean_ref, *, kernel_size):
    """One (batch, channel-tile) block.

    x_ref, res_ref, mean_ref : (TC, L) -- channels on sublanes, time on lanes.
    """
    pad = (kernel_size - 1) // 2
    rows, L = x_ref.shape

    x = x_ref[...].astype(jnp.float32)            # single widening pass

    if pad > 0:
        # Edge-replication padding, built in VMEM (never materialized in HBM).
        left = jnp.broadcast_to(x[:, 0:1], (rows, pad))
        right = jnp.broadcast_to(x[:, L - 1:L], (rows, pad))
        xp = jnp.concatenate([left, x, right], axis=1)   # (rows, L + k - 1)
    else:
        xp = x

    acc = _windowed_sum(xp, L, kernel_size)
    mean = acc * (1.0 / kernel_size)

    mean_ref[...] = mean.astype(mean_ref.dtype)
    res_ref[...] = (x - mean).astype(res_ref.dtype)


def _pick_channel_tile(batch, channels, max_tile=256):
    """Channel (sublane) tile: full extent when small, multiple of 8 otherwise."""
    if channels > max_tile:
        return max_tile                     # multiple of 8; VMEM-safe on v7x
    if batch == 1 and channels >= 16:
        # Split channels so the grid has >= 2 parallel steps (dual TC / megacore).
        half = -(-channels // 2)
        return -(-half // 8) * 8            # round up to a sublane multiple
    return channels                         # full extent (always a legal block dim)


def series_decomp(x, kernel_size):
    """x: (B, L, C). Returns (res, moving_mean), both (B, L, C)."""
    if kernel_size < 1 or kernel_size % 2 == 0:
        raise ValueError(
            "series_decomp requires an odd kernel_size >= 1 (even kernel sizes "
            f"change the reference module's output length); got {kernel_size}.")
    B, L, C = x.shape

    # Channel-first internal layout: time on the lane axis -> lane-dense stores.
    xt = jnp.transpose(x, (0, 2, 1))        # (B, C, L)

    tc = _pick_channel_tile(B, C)
    grid = (B, pl.cdiv(C, tc))

    def _spec():
        return pl.BlockSpec((pl.Squeezed(), tc, L), lambda b, c: (b, c, 0))

    kernel = functools.partial(_decomp_kernel, kernel_size=kernel_size)
    res_t, mean_t = pl.pallas_call(
        kernel,
        out_shape=(
            jax.ShapeDtypeStruct((B, C, L), x.dtype),
            jax.ShapeDtypeStruct((B, C, L), x.dtype),
        ),
        grid_spec=pl.GridSpec(
            grid=grid,
            in_specs=[_spec()],
            out_specs=(_spec(), _spec()),
        ),
        compiler_params=pltpu.CompilerParams(
            dimension_semantics=("parallel", "parallel"),
        ),
    )(xt)

    res = jnp.transpose(res_t, (0, 2, 1))
    mean = jnp.transpose(mean_t, (0, 2, 1))
    return res, mean


def _reference(x, kernel_size):
    """Pure-JAX reference mirroring the PyTorch forward."""
    pad = (kernel_size - 1) // 2
    front = jnp.repeat(x[:, 0:1, :], pad, axis=1)
    end = jnp.repeat(x[:, -1:, :], pad, axis=1)
    xp = jnp.concatenate([front, x, end], axis=1)
    L = x.shape[1]
    mean = jnp.mean(
        jnp.stack([xp[:, i:i + L, :] for i in range(kernel_size)], axis=0), axis=0)
    return x - mean, mean


if __name__ == "__main__":
    key = jax.random.PRNGKey(0)
    cases = [
        ((2, 128, 8), 25),    # typical DLinear kernel_size; lane-dense L; grouped sum
        ((2, 96, 7), 5),      # odd channel count, non-128 L; small-K shift loop
        ((1, 128, 16), 25),   # B=1: channel axis split -> 2 parallel grid steps
    ]
    ok = True
    for shape, k in cases:
        key, sub = jax.random.split(key)
        x = jax.random.normal(sub, shape, dtype=jnp.float32)
        fn = jax.jit(functools.partial(series_decomp, kernel_size=k))
        res, mean = jax.block_until_ready(fn(x))
        res_ref, mean_ref = _reference(x, k)
        if not jnp.allclose(mean, mean_ref, atol=1e-5, rtol=1e-5):
            ok = False
            print(f"moving_mean mismatch {shape} K={k}")
        if not jnp.allclose(res, res_ref, atol=1e-5, rtol=1e-5):
            ok = False
            print(f"residual mismatch {shape} K={k}")
    if ok:
        print("KERNEL_OK")
</pallas_src>

<mosaic_0001>
module attributes {stable_mosaic.version = 11 : i64} {
  func.func @_decomp_kernel(%arg0: i32, %arg1: i32, %arg2: memref<1x8x128xf32, #tpu.memory_space<vmem>>, %arg3: memref<1x8x128xf32, #tpu.memory_space<vmem>>, %arg4: memref<1x8x128xf32, #tpu.memory_space<vmem>>) attributes {dimension_semantics = [#tpu.dimension_semantics<parallel>, #tpu.dimension_semantics<parallel>], iteration_bounds = array<i64: 2, 1>, scalar_prefetch = 0 : i64, scratch_operands = 0 : i64, tpu.core_type = #tpu.core_type<tc>, window_params = [{transform_indices = @transform_0, window_bounds = array<i64: 1, 8, 128>}, {transform_indices = @transform_1, window_bounds = array<i64: 1, 8, 128>}, {transform_indices = @transform_2, window_bounds = array<i64: 1, 8, 128>}]} {
    %c0 = arith.constant 0 : index
    %c0_0 = arith.constant 0 : index
    %c0_1 = arith.constant 0 : index
    %0 = vector.load %arg2[%c0, %c0_0, %c0_1] : memref<1x8x128xf32, #tpu.memory_space<vmem>>, vector<1x8x128xf32>
    %1 = vector.shape_cast %0 : vector<1x8x128xf32> to vector<8x128xf32>
    %2 = vector.extract_strided_slice %1 {offsets = [0, 0], sizes = [8, 1], strides = [1, 1]} : vector<8x128xf32> to vector<8x1xf32>
    %3 = vector.shape_cast %2 : vector<8x1xf32> to vector<8x1xf32>
    %4 = vector.broadcast %3 : vector<8x1xf32> to vector<8x12xf32>
    %5 = vector.extract_strided_slice %1 {offsets = [0, 127], sizes = [8, 1], strides = [1, 1]} : vector<8x128xf32> to vector<8x1xf32>
    %6 = vector.shape_cast %5 : vector<8x1xf32> to vector<8x1xf32>
    %7 = vector.broadcast %6 : vector<8x1xf32> to vector<8x12xf32>
    %8 = tpu.concatenate %4, %1, %7 in 1 : vector<8x12xf32>, vector<8x128xf32>, vector<8x12xf32> -> vector<8x152xf32>
    %9 = vector.extract_strided_slice %8 {offsets = [0, 0], sizes = [8, 148], strides = [1, 1]} : vector<8x152xf32> to vector<8x148xf32>
    %10 = vector.extract_strided_slice %8 {offsets = [0, 1], sizes = [8, 148], strides = [1, 1]} : vector<8x152xf32> to vector<8x148xf32>
    %11 = arith.addf %9, %10 : vector<8x148xf32>
    %12 = vector.extract_strided_slice %8 {offsets = [0, 2], sizes = [8, 148], strides = [1, 1]} : vector<8x152xf32> to vector<8x148xf32>
    %13 = arith.addf %11, %12 : vector<8x148xf32>
    %14 = vector.extract_strided_slice %8 {offsets = [0, 3], sizes = [8, 148], strides = [1, 1]} : vector<8x152xf32> to vector<8x148xf32>
    %15 = arith.addf %13, %14 : vector<8x148xf32>
    %16 = vector.extract_strided_slice %8 {offsets = [0, 4], sizes = [8, 148], strides = [1, 1]} : vector<8x152xf32> to vector<8x148xf32>
    %17 = arith.addf %15, %16 : vector<8x148xf32>
    %18 = vector.extract_strided_slice %17 {offsets = [0, 0], sizes = [8, 128], strides = [1, 1]} : vector<8x148xf32> to vector<8x128xf32>
    %19 = vector.extract_strided_slice %17 {offsets = [0, 5], sizes = [8, 128], strides = [1, 1]} : vector<8x148xf32> to vector<8x128xf32>
    %20 = arith.addf %18, %19 : vector<8x128xf32>
    %21 = vector.extract_strided_slice %17 {offsets = [0, 10], sizes = [8, 128], strides = [1, 1]} : vector<8x148xf32> to vector<8x128xf32>
    %22 = arith.addf %20, %21 : vector<8x128xf32>
    %23 = vector.extract_strided_slice %17 {offsets = [0, 15], sizes = [8, 128], strides = [1, 1]} : vector<8x148xf32> to vector<8x128xf32>
    %24 = arith.addf %22, %23 : vector<8x128xf32>
    %25 = vector.extract_strided_slice %17 {offsets = [0, 20], sizes = [8, 128], strides = [1, 1]} : vector<8x148xf32> to vector<8x128xf32>
    %26 = arith.addf %24, %25 : vector<8x128xf32>
    %cst = arith.constant 4.000000e-02 : f32
    %27 = vector.broadcast %cst : f32 to vector<8x128xf32>
    %28 = arith.mulf %26, %27 : vector<8x128xf32>
    %c0_2 = arith.constant 0 : index
    %c0_3 = arith.constant 0 : index
    %c0_4 = arith.constant 0 : index
    %29 = vector.load %arg4[%c0_2, %c0_3, %c0_4] : memref<1x8x128xf32, #tpu.memory_space<vmem>>, vector<1x8x128xf32>
    %30 = vector.shape_cast %29 : vector<1x8x128xf32> to vector<8x128xf32>
    %31 = vector.shape_cast %28 : vector<8x128xf32> to vector<1x8x128xf32>
    tpu.vector_store %arg4[%c0_2, %c0_3, %c0_4], %31 {strides = array<i32>} : memref<1x8x128xf32, #tpu.memory_space<vmem>>, vector<1x8x128xf32>,
    %32 = arith.subf %1, %28 : vector<8x128xf32>
    %c0_5 = arith.constant 0 : index
    %c0_6 = arith.constant 0 : index
    %c0_7 = arith.constant 0 : index
    %33 = vector.load %arg3[%c0_5, %c0_6, %c0_7] : memref<1x8x128xf32, #tpu.memory_space<vmem>>, vector<1x8x128xf32>
    %34 = vector.shape_cast %33 : vector<1x8x128xf32> to vector<8x128xf32>
    %35 = vector.shape_cast %32 : vector<8x128xf32> to vector<1x8x128xf32>
    tpu.vector_store %arg3[%c0_5, %c0_6, %c0_7], %35 {strides = array<i32>} : memref<1x8x128xf32, #tpu.memory_space<vmem>>, vector<1x8x128xf32>,
    return
  }
  func.func @transform_0(%arg0: i32, %arg1: i32) -> (i32, i32, i32) {
    %c0_i32 = arith.constant 0 : i32
    %c0_i32_0 = arith.constant 0 : i32
    return %arg0, %arg1, %c0_i32 : i32, i32, i32
  }
  func.func @transform_1(%arg0: i32, %arg1: i32) -> (i32, i32, i32) {
    %c0_i32 = arith.constant 0 : i32
    %c0_i32_0 = arith.constant 0 : i32
    return %arg0, %arg1, %c0_i32 : i32, i32, i32
  }
  func.func @transform_2(%arg0: i32, %arg1: i32) -> (i32, i32, i32) {
    %c0_i32 = arith.constant 0 : i32
    %c0_i32_0 = arith.constant 0 : i32
    return %arg0, %arg1, %c0_i32 : i32, i32, i32
  }
}

</mosaic_0001>

<llo_original>
// kernel: series_decomp.1
$region0: #{series_decomp.1}
  #allocation0 [shape = 'u32[]', space=smem, size = 0x4, offset = 0x4, fixed_abs, tag = 'smem constant byte address 0x4 - core index']
  #allocation1 [shape = 'u32[144,128]{1,0:T(1,128)}', space=vmem, size = 0x12000, scoped, tag = 'internal scratch']
  %s0 = inlined_call_operand.hbm [shape: f32[2,8,128], index: 0, kind: input, shape index: {}]
  %s1 = inlined_call_operand.hbm [shape: f32[2,8,128], index: 1, kind: output, shape index: {0}]
  %s2 = inlined_call_operand.hbm [shape: f32[2,8,128], index: 2, kind: output, shape index: {1}]
  %3 = xla_tuple %s1, %s2
  %s4 = sld [smem:[#allocation0]]
  $region49: #{series_decomp.1} parent=0
    _
  %s6 = ssub.s32 1, %s4
  %s7 = scalar_select 0, %s6, %s4
  $region1: #{series_decomp.1} parent=0
    #allocation2 [shape = 'u8[8192]{0}', space=vmem, size = 0x2000, scoped, tag = 'input window, operand 0']
    #allocation3 [shape = 's32[2]{0}', space=sflag, size = 0x8, scoped, tag = 'scoped memory for series_decomp.1']
    #allocation4 [shape = 's32[2]{0}', space=sflag, size = 0x8, scoped, tag = 'scoped memory for series_decomp.1']
    #allocation5 [shape = 'u8[8192]{0}', space=vmem, size = 0x2000, scoped, tag = 'output window, operand 0']
    #allocation6 [shape = 'u8[8192]{0}', space=vmem, size = 0x2000, scoped, tag = 'output window, operand 1']
    #allocation7 [shape = 's32[2]{0}', space=sflag, size = 0x8, scoped, tag = 'scoped memory for series_decomp.1']
    %8 = vsyncpa [#allocation3], 0
    %s9 = scalar_lea.sflag [#allocation3], 1
    %10 = vsyncpa %s9, 0
    %11 = vsyncpa [#allocation4], 0
    %s12 = scalar_lea.sflag [#allocation4], 1
    %13 = vsyncpa %s12, 0
    %14 = vsyncpa [#allocation7], 0
    %s15 = scalar_lea.sflag [#allocation7], 1
    %16 = vsyncpa %s15, 0
    loop: start=0, step=1, limit=4
    $region2: #{series_decomp.1} parent=1 // loop_pre_header
      _
    $region3: #{series_decomp.1} parent=1 // loop_header
      %s18 = sphi 0, %s22
      %p19 = scmp.ge.s32.totalorder %s18, 4
      %s25 = sphi 0, %s37
      %s26 = sphi 0, %s33
      %s27 = sphi 0, %s25
      %s28 = sphi 0, %s26
      %s29 = sphi 0, %s27
      %s30 = sphi 0, %s28
      %s42 = sphi 0, %s44
      %s45 = sphi 0, %s42
      %s46 = sphi 0, %s45
      %s62 = sphi 0, %s46
      %s70 = sphi 0, %s72
      %s73 = sphi 0, %s70
      %s74 = sphi 0, %s73
      %s90 = sphi 0, %s74
      %s98 = sphi 0, %s100
      %s101 = sphi 0, %s98
      %s102 = sphi 0, %s101
      %s118 = sphi 0, %s102
    $region4: #{series_decomp.1} parent=1 // loop_header_branch
      %21 = sbr.rel (%p19) target = $region8
    $region5: #{series_decomp.1} parent=1 // loop_body
      %s23 = ssub.s32 %s18, 1
      %s24 = ssub.s32 %s18, 2
      %s31 = sadd.s32 1, %s26
      %p32 = scmp.ge.s32.totalorder %s31, 1
      %s33 = scalar_select %p32, 0, %s31
      %s34 = sadd.s32 1, %s25
      %s35 = scalar_select %p32, %s34, %s25
      %p36 = scmp.ge.s32.totalorder %s35, 2
      %s37 = scalar_select %p36, 0, %s35
      %s38 = ssub.s32 %s25, %s37
      %s39 = ssub.s32 %s26, %s33
      %s40 = sor.u32 %s38, %s39
      %p41 = scmp.eq.s32.totalorder %s40, 0
      %s43 = sadd.s32 %s42, 1
      %s44 = scalar_select %p41, %s42, %s43
      %p47 = pneg %p41
      %p48 = scmp.eq.s32.totalorder %s18, 1
      %p49 = por %p47, %p48
      %p50 = scmp.ne.s32.totalorder %s42, %s45
      %p51 = scmp.eq.s32.totalorder %s18, 0
      %p52 = por %p50, %p51
      %p53 = scmp.ne.s32.totalorder %s42, %s45
      %p54 = scmp.eq.s32.totalorder %s23, 1
      %p55 = por %p53, %p54
      %p56 = scmp.ne.s32.totalorder %s45, %s46
      %p57 = scmp.eq.s32.totalorder %s23, 0
      %p58 = por %p56, %p57
      %p59 = scmp.ne.s32.totalorder %s45, %s46
      %p60 = scmp.eq.s32.totalorder %s24, 1
      %p61 = por %p59, %p60
      %p63 = scmp.ne.s32.totalorder %s46, %s62
      %p64 = scmp.eq.s32.totalorder %s24, 0
      %p65 = por %p63, %p64
      %s66 = ssub.s32 %s25, %s37
      %s67 = ssub.s32 %s26, %s33
      %s68 = sor.u32 %s66, %s67
      %p69 = scmp.eq.s32.totalorder %s68, 0
      %s71 = sadd.s32 %s70, 1
      %s72 = scalar_select %p69, %s70, %s71
      %p75 = pneg %p69
      %p76 = scmp.eq.s32.totalorder %s18, 1
      %p77 = por %p75, %p76
      %p78 = scmp.ne.s32.totalorder %s70, %s73
      %p79 = scmp.eq.s32.totalorder %s18, 0
      %p80 = por %p78, %p79
      %p81 = scmp.ne.s32.totalorder %s70, %s73
      %p82 = scmp.eq.s32.totalorder %s23, 1
      %p83 = por %p81, %p82
      %p84 = scmp.ne.s32.totalorder %s73, %s74
      %p85 = scmp.eq.s32.totalorder %s23, 0
      %p86 = por %p84, %p85
      %p87 = scmp.ne.s32.totalorder %s73, %s74
      %p88 = scmp.eq.s32.totalorder %s24, 1
      %p89 = por %p87, %p88
      %p91 = scmp.ne.s32.totalorder %s74, %s90
      %p92 = scmp.eq.s32.totalorder %s24, 0
      %p93 = por %p91, %p92
      %s94 = ssub.s32 %s25, %s37
      %s95 = ssub.s32 %s26, %s33
      %s96 = sor.u32 %s94, %s95
      %p97 = scmp.eq.s32.totalorder %s96, 0
      %s99 = sadd.s32 %s98, 1
      %s100 = scalar_select %p97, %s98, %s99
      %p103 = pneg %p97
      %p104 = scmp.eq.s32.totalorder %s18, 1
      %p105 = por %p103, %p104
      %p106 = scmp.ne.s32.totalorder %s98, %s101
      %p107 = scmp.eq.s32.totalorder %s18, 0
      %p108 = por %p106, %p107
      %p109 = scmp.ne.s32.totalorder %s98, %s101
      %p110 = scmp.eq.s32.totalorder %s23, 1
      %p111 = por %p109, %p110
      %p112 = scmp.ne.s32.totalorder %s101, %s102
      %p113 = scmp.eq.s32.totalorder %s23, 0
      %p114 = por %p112, %p113
      %p115 = scmp.ne.s32.totalorder %s101, %s102
      %p116 = scmp.eq.s32.totalorder %s24, 1
      %p117 = por %p115, %p116
      %p119 = scmp.ne.s32.totalorder %s102, %s118
      %p120 = scmp.eq.s32.totalorder %s24, 0
      %p121 = por %p119, %p120
      %p122 = scmp.le.s32.totalorder 1, %s18
      %p123 = scmp.lt.s32.totalorder %s18, 3
      %p124 = pnand %p122, %p123
      %p125 = pneg %p124
      // Predicated region
      $region9: #{series_decomp.1} parent=5 // pred_check
        _
      $region10: #{series_decomp.1} parent=5 // pred_check_branch
        %127 = sbr.rel (%p124) target = $region12
      $region11: #{series_decomp.1} parent=5 // pred_region
        %s128 = ssub.s32 %s18, 1
      $region12: #{series_decomp.1} parent=5 // pred_fallthru
        _
      %p129 = scmp.lt.s32.totalorder %s18, 2
      // Predicated region
      $region13: #{series_decomp.1} parent=5 // pred_check
        %p130 = pneg %p129
      $region14: #{series_decomp.1} parent=5 // pred_check_branch
        %132 = sbr.rel (%p130) target = $region16
      $region15: #{series_decomp.1} parent=5 // pred_region
        // Predicated region
        $region17: #{series_decomp.1} parent=15 // pred_check
          %p133 = pneg %p52
        $region18: #{series_decomp.1} parent=15 // pred_check_branch
          %135 = sbr.rel (%p133) target = $region20
        $region19: #{series_decomp.1} parent=15 // pred_region
          %s136 = sand.u32 %s42, 1
          %s137 = scalar_lea.sflag [#allocation3], %s136
          %s138 = sand.u32 %s42, 1
          %s139 = smul.addr %s138, 8
          %s140 = scalar_lea.vmem [#allocation2], %s139
          %s142 = ssub.s32 128, 128
          %143 = vsyncadd %s137, %s142
          %s144 = sadd.s32 %s26, %s25
          %s145 = smul.addr %s144, 128
          %s146 = scalar_lea.hbm %s0, %s145
          %s148 = sshll.u32 %s140, 4
          %s149 = int_to_ptr.vmem [resolvable:$true] %s148
          %151 = dma.hbm_to_vmem [thread:$0]  %s146, 128, %s149, %s137
        $region20: #{series_decomp.1} parent=15 // pred_fallthru
          _
      $region16: #{series_decomp.1} parent=5 // pred_fallthru
        _
      %p152 = scmp.le.s32.totalorder 1, %s18
      %p153 = scmp.lt.s32.totalorder %s18, 3
      %p154 = pnand %p152, %p153
      %p155 = pneg %p154
      // Predicated region
      $region21: #{series_decomp.1} parent=5 // pred_check
        _
      $region22: #{series_decomp.1} parent=5 // pred_check_branch
        %157 = sbr.rel (%p154) target = $region24
      $region23: #{series_decomp.1} parent=5 // pred_region
        %s158 = ssub.s32 %s18, 1
        %s159 = sand.u32 %s45, 1
        %s160 = scalar_lea.sflag [#allocation3], %s159
        %s161 = sand.u32 %s45, 1
        %s162 = smul.addr %s161, 8
        %s163 = scalar_lea.vmem [#allocation2], %s162
        // Predicated region
        $region25: #{series_decomp.1} parent=23 // pred_check
          %p164 = pneg %p58
        $region26: #{series_decomp.1} parent=23 // pred_check_branch
          %166 = sbr.rel (%p164) target = $region28
        $region27: #{series_decomp.1} parent=23 // pred_region
          %167 = dma.done %s160, 128
        $region28: #{series_decomp.1} parent=23 // pred_fallthru
          _
        %s168 = sand.u32 %s45, 1
        %s169 = scalar_lea.sflag [#allocation3], %s168
        %s170 = sand.u32 %s45, 1
        %s171 = smul.addr %s170, 8
        %s172 = scalar_lea.vmem [#allocation2], %s171
        %p173 = pneg %p58
        %p174 = pneg %p55
        %p175 = pneg %p86
        %p176 = pneg %p83
        %s177 = sand.u32 %s73, 1
        %s178 = scalar_lea.sflag [#allocation4], %s177
        %s179 = sand.u32 %s73, 1
        %s180 = smul.addr %s179, 8
        %s181 = scalar_lea.vmem [#allocation5], %s180
        %p182 = pneg %p114
        %p183 = pneg %p111
        %s184 = sand.u32 %s101, 1
        %s185 = scalar_lea.sflag [#allocation7], %s184
        %s186 = sand.u32 %s101, 1
        %s187 = smul.addr %s186, 8
        %s188 = scalar_lea.vmem [#allocation6], %s187
        %v189 = vld [vmem:[%s163] sm:$0xff]
        %191 = vset.pattern.permute.xlu0 0
        %192 = vperm.xlu0 %191, %v189
        %v193 = vpop.permute.xlu0 %192
        %195 = vset.pattern.permute.xlu0 127
        %196 = vperm.xlu0 %195, %v189
        %v197 = vpop.permute.xlu0 %196
        %199 = vrot.lane.b32.xlu0 %v189, 12
        %v200 = vpop.permute.xlu0 %199
        %vm202 = vcmask 97280
        %v203 = vsel %vm202, %v193, %v200
        %v204 = vsel %vm202, %v200, %v197
        %207 = vrot.lane.b32.xlu0 %v203, 127
        %v208 = vpop.permute.xlu0 %207
        %209 = vrot.lane.b32.xlu0 %v204, 127
        %v210 = vpop.permute.xlu0 %209
        %vm211 = vcmask 1039360
        %v212 = vsel %vm211, %v208, %v210
        %v215 = vadd.f32 %v203, %v212
        %v216 = vadd.f32 %v204, %v210
        %217 = vrot.lane.b32.xlu0 %v203, 126
        %v218 = vpop.permute.xlu0 %217
        %219 = vrot.lane.b32.xlu0 %v204, 126
        %v220 = vpop.permute.xlu0 %219
        %vm221 = vcmask 1031168
        %v222 = vsel %vm221, %v218, %v220
        %v225 = vadd.f32 %v215, %v222
        %v226 = vadd.f32 %v216, %v220
        %227 = vrot.lane.b32.xlu0 %v203, 125
        %v228 = vpop.permute.xlu0 %227
        %229 = vrot.lane.b32.xlu0 %v204, 125
        %v230 = vpop.permute.xlu0 %229
        %vm231 = vcmask 1022976
        %v232 = vsel %vm231, %v228, %v230
        %v235 = vadd.f32 %v225, %v232
        %v236 = vadd.f32 %v226, %v230
        %237 = vrot.lane.b32.xlu0 %v203, 124
        %v238 = vpop.permute.xlu0 %237
        %239 = vrot.lane.b32.xlu0 %v204, 124
        %v240 = vpop.permute.xlu0 %239
        %vm241 = vcmask 1014784
        %v242 = vsel %vm241, %v238, %v240
        %v245 = vadd.f32 %v235, %v242
        %v246 = vadd.f32 %v236, %v240
        %249 = vrot.lane.b32.xlu0 %v245, 123
        %v250 = vpop.permute.xlu0 %249
        %251 = vrot.lane.b32.xlu0 %v246, 123
        %v252 = vpop.permute.xlu0 %251
        %vm253 = vcmask 1006592
        %v254 = vsel %vm253, %v250, %v252
        %v256 = vadd.f32 %v245, %v254
        %257 = vrot.lane.b32.xlu0 %v245, 118
        %v258 = vpop.permute.xlu0 %257
        %259 = vrot.lane.b32.xlu0 %v246, 118
        %v260 = vpop.permute.xlu0 %259
        %vm261 = vcmask 965632
        %v262 = vsel %vm261, %v258, %v260
        %v264 = vadd.f32 %v256, %v262
        %265 = vrot.lane.b32.xlu0 %v245, 113
        %v266 = vpop.permute.xlu0 %265
        %267 = vrot.lane.b32.xlu0 %v246, 113
        %v268 = vpop.permute.xlu0 %267
        %vm269 = vcmask 924672
        %v270 = vsel %vm269, %v266, %v268
        %v272 = vadd.f32 %v264, %v270
        %273 = vrot.lane.b32.xlu0 %v245, 108
        %v274 = vpop.permute.xlu0 %273
        %275 = vrot.lane.b32.xlu0 %v246, 108
        %v276 = vpop.permute.xlu0 %275
        %vm277 = vcmask 883712
        %v278 = vsel %vm277, %v274, %v276
        %v280 = vadd.f32 %v272, %v278
        %v281 = vmul.f32 %v280, 0.04
        %282 = vst [vmem:[%s188] sm:$0xff] %v281
        %v283 = vsub.f32 %v189, %v281
        %284 = vst [vmem:[%s181] sm:$0xff] %v283
        %s285 = sand.u32 %s73, 1
        %s286 = scalar_lea.sflag [#allocation4], %s285
        %s287 = sand.u32 %s73, 1
        %s288 = smul.addr %s287, 8
        %s289 = scalar_lea.vmem [#allocation5], %s288
        %s290 = sand.u32 %s101, 1
        %s291 = scalar_lea.sflag [#allocation7], %s290
        %s292 = sand.u32 %s101, 1
        %s293 = smul.addr %s292, 8
        %s294 = scalar_lea.vmem [#allocation6], %s293
        // Predicated region
        $region29: #{series_decomp.1} parent=23 // pred_check
          %p295 = pneg %p83
        $region30: #{series_decomp.1} parent=23 // pred_check_branch
          %297 = sbr.rel (%p295) target = $region32
        $region31: #{series_decomp.1} parent=23 // pred_region
          %s299 = ssub.s32 128, 128
          %300 = vsyncadd %s286, %s299
          %s301 = sadd.s32 %s28, %s27
          %s302 = smul.addr %s301, 128
          %s303 = scalar_lea.hbm %s1, %s302
          %s305 = sshll.u32 %s289, 4
          %s306 = int_to_ptr.vmem [resolvable:$true] %s305
          %308 = dma.vmem_to_hbm [thread:$0]  %s306, 128, %s303, %s286
        $region32: #{series_decomp.1} parent=23 // pred_fallthru
          _
        // Predicated region
        $region33: #{series_decomp.1} parent=23 // pred_check
          %p309 = pneg %p111
        $region34: #{series_decomp.1} parent=23 // pred_check_branch
          %311 = sbr.rel (%p309) target = $region36
        $region35: #{series_decomp.1} parent=23 // pred_region
          %s313 = ssub.s32 128, 128
          %314 = vsyncadd %s291, %s313
          %s315 = sadd.s32 %s28, %s27
          %s316 = smul.addr %s315, 128
          %s317 = scalar_lea.hbm %s2, %s316
          %s319 = sshll.u32 %s294, 4
          %s320 = int_to_ptr.vmem [resolvable:$true] %s319
          %322 = dma.vmem_to_hbm [thread:$0]  %s320, 128, %s317, %s291
        $region36: #{series_decomp.1} parent=23 // pred_fallthru
          _
      $region24: #{series_decomp.1} parent=5 // pred_fallthru
        _
      %p323 = scmp.le.s32.totalorder 2, %s18
      // Predicated region
      $region37: #{series_decomp.1} parent=5 // pred_check
        %p324 = pneg %p323
      $region38: #{series_decomp.1} parent=5 // pred_check_branch
        %326 = sbr.rel (%p324) target = $region40
      $region39: #{series_decomp.1} parent=5 // pred_region
        %s327 = ssub.s32 %s18, 2
        // Predicated region
        $region41: #{series_decomp.1} parent=39 // pred_check
          %p328 = pneg %p89
        $region42: #{series_decomp.1} parent=39 // pred_check_branch
          %330 = sbr.rel (%p328) target = $region44
        $region43: #{series_decomp.1} parent=39 // pred_region
          %s331 = sand.u32 %s74, 1
          %s332 = scalar_lea.sflag [#allocation4], %s331
          %s333 = sand.u32 %s74, 1
          %s334 = smul.addr %s333, 8
          %s335 = scalar_lea.vmem [#allocation5], %s334
          %336 = dma.done %s332, 128
        $region44: #{series_decomp.1} parent=39 // pred_fallthru
          _
        // Predicated region
        $region45: #{series_decomp.1} parent=39 // pred_check
          %p337 = pneg %p117
        $region46: #{series_decomp.1} parent=39 // pred_check_branch
          %339 = sbr.rel (%p337) target = $region48
        $region47: #{series_decomp.1} parent=39 // pred_region
          %s340 = sand.u32 %s102, 1
          %s341 = scalar_lea.sflag [#allocation7], %s340
          %s342 = sand.u32 %s102, 1
          %s343 = smul.addr %s342, 8
          %s344 = scalar_lea.vmem [#allocation6], %s343
          %345 = dma.done %s341, 128
        $region48: #{series_decomp.1} parent=39 // pred_fallthru
          _
      $region40: #{series_decomp.1} parent=5 // pred_fallthru
        _
    $region6: #{series_decomp.1} parent=1 // loop_footer
      %s22 = sadd.s32 1, %s18
    $region7: #{series_decomp.1} parent=1 // loop_footer_branch
      %17 = sbr.rel target = $region3
    $region8: #{series_decomp.1} parent=1 // loop_exit
      _
    %346 = vsyncpa [#allocation3], 1
    %s347 = scalar_lea.sflag [#allocation3], 1
    %348 = vsyncpa %s347, 1
    %349 = vsyncpa [#allocation4], 1
    %s350 = scalar_lea.sflag [#allocation4], 1
    %351 = vsyncpa %s350, 1
    %352 = vsyncpa [#allocation7], 1
    %s353 = scalar_lea.sflag [#allocation7], 1
    %354 = vsyncpa %s353, 1

</llo_original>
